<compile_context>
chip_gen: v7x
topology: tpu7x:2x2x1
jax: 0.10.0
libtpu: 0.0.40
codegen_flags: <defaults>
</compile_context>

<pallas_src>
import math

import jax
import jax.numpy as jnp
from jax.experimental import pallas as pl
from jax.experimental.pallas import tpu as pltpu


def _qkv_projection_kernel(x_ref, w_ref, qkv_ref):
    # x_ref: (tm, d_in), w_ref: (d_in, 3*dp), qkv_ref: (tm, 3*dp)
    qkv_ref[...] = jnp.dot(
        x_ref[...], w_ref[...], preferred_element_type=jnp.float32
    ).astype(qkv_ref.dtype)


def _flash_attention_kernel(q_ref, k_ref, v_ref, o_ref, m_sc, l_sc, acc_sc):
    # q_ref: (tq, dp)   k_ref / v_ref: (tk, dp)   o_ref: (tq, dp)
    qi = pl.program_id(1)
    ki = pl.program_id(2)
    tq = q_ref.shape[0]
    tk = k_ref.shape[0]
    q_first = qi * tq          # first global query row of this tile
    k_first = ki * tk          # first global key column of this tile

    @pl.when(ki == 0)
    def _init():
        m_sc[...] = jnp.full_like(m_sc, -jnp.inf)
        l_sc[...] = jnp.zeros_like(l_sc)
        acc_sc[...] = jnp.zeros_like(acc_sc)

    # Tile entirely above the causal diagonal (every key is in the future of
    # every query) -> skip all compute.
    visit = k_first <= q_first + (tq - 1)
    # Tile straddles the diagonal -> needs the iota mask; strictly-below tiles
    # are fully unmasked and skip the O(tq*tk) iota/compare/select entirely.
    straddles = k_first + (tk - 1) > q_first

    @pl.when(visit)
    def _compute():
        q = q_ref[...]                       # already scaled by 1/sqrt(d_out)
        k = k_ref[...]
        v = v_ref[...]
        # Contract the feature dims directly (no k.T transpose through the XLU).
        s = jax.lax.dot_general(
            q, k, (((1,), (1,)), ((), ())),
            preferred_element_type=jnp.float32)           # (tq, tk)

        def online_softmax_update(s_val):
            m_prev = m_sc[...]
            m_new = jnp.maximum(m_prev, s_val.max(axis=-1, keepdims=True))
            alpha = jnp.exp(m_prev - m_new)
            p = jnp.exp(s_val - m_new)
            l_sc[...] = alpha * l_sc[...] + p.sum(axis=-1, keepdims=True)
            acc_sc[...] = alpha * acc_sc[...] + jnp.dot(
                p.astype(v.dtype), v, preferred_element_type=jnp.float32)
            m_sc[...] = m_new

        @pl.when(straddles)
        def _diagonal_tile():
            row = q_first + jax.lax.broadcasted_iota(jnp.int32, (tq, tk), 0)
            col = k_first + jax.lax.broadcasted_iota(jnp.int32, (tq, tk), 1)
            online_softmax_update(jnp.where(col > row, -jnp.inf, s))

        @pl.when(jnp.logical_not(straddles))
        def _below_diagonal_tile():
            online_softmax_update(s)

    @pl.when(ki == pl.num_programs(2) - 1)
    def _finalize():
        # pl.reciprocal(..., approx=True) would use the otherwise-idle EUP slot;
        # kept exact because this script asserts vs the reference at 1e-4.
        inv_l = pl.reciprocal(l_sc[...], approx=False)
        o_ref[...] = (acc_sc[...] * inv_l).astype(o_ref.dtype)


def _round_up(x, m):
    return (x + m - 1) // m * m


def _pick_block(requested, dim):
    blk = min(requested, dim)
    if dim % blk != 0:
        raise ValueError(f"sequence length {dim} must be divisible by block {blk}")
    return blk


def causal_attention(x, w_query, w_key, w_value, *,
                     block_q=128, block_k=128, block_proj=256):
    """x: (b, T, d_in). w_*: (d_out, d_in) (PyTorch Linear layout). Eval mode."""
    b, T, d_in = x.shape
    d_out = w_query.shape[0]
    dp = _round_up(d_out, 128)            # lane-dense padded feature width
    scale = 1.0 / math.sqrt(d_out)        # uses the real d_out (= keys.shape[-1])

    # Fuse the three projections into one (d_in, 3*dp) operand; fold the softmax
    # scale into the query weight; zero-pad d_out -> dp for lane-dense tiles.
    def pad_cols(w):
        return jnp.pad(w, ((0, 0), (0, dp - d_out)))

    w_qkv = jnp.concatenate(
        [pad_cols(w_query.T * scale), pad_cols(w_key.T), pad_cols(w_value.T)],
        axis=1)                            # (d_in, 3*dp)

    tm = _pick_block(block_proj, T)
    tq = _pick_block(block_q, T)
    tk = _pick_block(block_k, T)

    # ---- Kernel 1: fused QKV projection: qkv[b, t, :] = x[b, t, :] @ w_qkv ----
    qkv = pl.pallas_call(
        _qkv_projection_kernel,
        out_shape=jax.ShapeDtypeStruct((b, T, 3 * dp), x.dtype),
        grid_spec=pltpu.PrefetchScalarGridSpec(
            num_scalar_prefetch=0,
            grid=(b, T // tm),
            in_specs=[
                pl.BlockSpec((None, tm, d_in), lambda bi, ti: (bi, ti, 0)),
                pl.BlockSpec((d_in, 3 * dp), lambda bi, ti: (0, 0)),
            ],
            out_specs=pl.BlockSpec((None, tm, 3 * dp), lambda bi, ti: (bi, ti, 0)),
        ),
        compiler_params=pltpu.CompilerParams(
            dimension_semantics=("parallel", "parallel")),
    )(x, w_qkv)

    # ---- Kernel 2: flash attention over (batch, q-tiles, kv-tiles) ----
    out_padded = pl.pallas_call(
        _flash_attention_kernel,
        out_shape=jax.ShapeDtypeStruct((b, T, dp), x.dtype),
        grid_spec=pltpu.PrefetchScalarGridSpec(
            num_scalar_prefetch=0,
            grid=(b, T // tq, T // tk),      # KV (reduction) axis last
            in_specs=[
                # q / k / v are dp-wide slices of the same fused qkv array
                # (block index 0 / 1 / 2 along the last axis).
                pl.BlockSpec((None, tq, dp), lambda bi, qi, ki: (bi, qi, 0)),
                pl.BlockSpec((None, tk, dp), lambda bi, qi, ki: (bi, ki, 1)),
                pl.BlockSpec((None, tk, dp), lambda bi, qi, ki: (bi, ki, 2)),
            ],
            out_specs=pl.BlockSpec((None, tq, dp), lambda bi, qi, ki: (bi, qi, 0)),
            scratch_shapes=[
                pltpu.VMEM((tq, 1), jnp.float32),    # running max m
                pltpu.VMEM((tq, 1), jnp.float32),    # running denom l
                pltpu.VMEM((tq, dp), jnp.float32),   # f32 output accumulator
            ],
        ),
        compiler_params=pltpu.CompilerParams(
            dimension_semantics=("parallel", "parallel", "arbitrary")),
    )(qkv, qkv, qkv)

    # Drop the zero-padded feature columns to match the module's output shape.
    return out_padded[..., :d_out]


def reference_causal_attention(x, w_query, w_key, w_value):
    """Pure-JAX reference mirroring the PyTorch forward (eval mode)."""
    q = x @ w_query.T
    k = x @ w_key.T
    v = x @ w_value.T
    scores = jnp.einsum("btd,bsd->bts", q, k)
    T = x.shape[1]
    mask = jnp.triu(jnp.ones((T, T), dtype=bool), k=1)
    scores = jnp.where(mask[None, :, :], -jnp.inf, scores)
    weights = jax.nn.softmax(scores / math.sqrt(k.shape[-1]), axis=-1)
    return weights @ v


if __name__ == "__main__":
    key = jax.random.PRNGKey(0)
    batch, seq, d_in, d_out = 2, 8, 32, 32

    kx, kq, kk, kv = jax.random.split(key, 4)
    x = jax.random.normal(kx, (batch, seq, d_in), dtype=jnp.float32)
    # Deterministic "Linear" weights, PyTorch layout (d_out, d_in), no bias.
    bound = 1.0 / math.sqrt(d_in)
    w_query = jax.random.uniform(kq, (d_out, d_in), jnp.float32, -bound, bound)
    w_key = jax.random.uniform(kk, (d_out, d_in), jnp.float32, -bound, bound)
    w_value = jax.random.uniform(kv, (d_out, d_in), jnp.float32, -bound, bound)

    out = causal_attention(x, w_query, w_key, w_value)
    out = jax.block_until_ready(out)

    ref = reference_causal_attention(x, w_query, w_key, w_value)
    assert out.shape == (batch, seq, d_out)
    assert jnp.allclose(out, ref, atol=1e-4, rtol=1e-4), "mismatch vs reference"

    print("KERNEL_OK")
</pallas_src>

<mosaic_0001>
module attributes {stable_mosaic.version = 11 : i64} {
  func.func @_qkv_projection_kernel(%arg0: i32, %arg1: i32, %arg2: memref<1x8x32xf32, #tpu.memory_space<vmem>>, %arg3: memref<32x384xf32, #tpu.memory_space<vmem>>, %arg4: memref<1x8x384xf32, #tpu.memory_space<vmem>>) attributes {dimension_semantics = [#tpu.dimension_semantics<parallel>, #tpu.dimension_semantics<parallel>], iteration_bounds = array<i64: 2, 1>, scalar_prefetch = 0 : i64, scratch_operands = 0 : i64, tpu.core_type = #tpu.core_type<tc>, window_params = [{transform_indices = @transform_0, window_bounds = array<i64: 1, 8, 32>}, {pipeline_mode = #tpu.pipeline_mode<synchronous>, transform_indices = @transform_1, window_bounds = array<i64: 32, 384>}, {transform_indices = @transform_2, window_bounds = array<i64: 1, 8, 384>}]} {
    %c0 = arith.constant 0 : index
    %c0_0 = arith.constant 0 : index
    %c0_1 = arith.constant 0 : index
    %0 = vector.load %arg2[%c0, %c0_0, %c0_1] : memref<1x8x32xf32, #tpu.memory_space<vmem>>, vector<1x8x32xf32>
    %1 = vector.shape_cast %0 : vector<1x8x32xf32> to vector<8x32xf32>
    %c0_2 = arith.constant 0 : index
    %c0_3 = arith.constant 0 : index
    %2 = vector.load %arg3[%c0_2, %c0_3] : memref<32x384xf32, #tpu.memory_space<vmem>>, vector<32x384xf32>
    %cst = arith.constant dense<0.000000e+00> : vector<8x384xf32>
    %3 = tpu.matmul %1, %2, %cst {dimension_numbers = #tpu.dot_dimension_numbers<[1], [0], [0], [1], [0, 0, 1, 1], [], []>} : vector<8x32xf32>, vector<32x384xf32>, vector<8x384xf32> -> vector<8x384xf32>
    %c0_4 = arith.constant 0 : index
    %c0_5 = arith.constant 0 : index
    %c0_6 = arith.constant 0 : index
    %4 = vector.load %arg4[%c0_4, %c0_5, %c0_6] : memref<1x8x384xf32, #tpu.memory_space<vmem>>, vector<1x8x384xf32>
    %5 = vector.shape_cast %4 : vector<1x8x384xf32> to vector<8x384xf32>
    %6 = vector.shape_cast %3 : vector<8x384xf32> to vector<1x8x384xf32>
    tpu.vector_store %arg4[%c0_4, %c0_5, %c0_6], %6 {strides = array<i32>} : memref<1x8x384xf32, #tpu.memory_space<vmem>>, vector<1x8x384xf32>,
    return
  }
  func.func @transform_0(%arg0: i32, %arg1: i32) -> (i32, i32, i32) {
    %c0_i32 = arith.constant 0 : i32
    %c0_i32_0 = arith.constant 0 : i32
    return %arg0, %arg1, %c0_i32 : i32, i32, i32
  }
  func.func @transform_1(%arg0: i32, %arg1: i32) -> (i32, i32) {
    %c0_i32 = arith.constant 0 : i32
    %c0_i32_0 = arith.constant 0 : i32
    %c0_i32_1 = arith.constant 0 : i32
    return %c0_i32, %c0_i32_0 : i32, i32
  }
  func.func @transform_2(%arg0: i32, %arg1: i32) -> (i32, i32, i32) {
    %c0_i32 = arith.constant 0 : i32
    %c0_i32_0 = arith.constant 0 : i32
    return %arg0, %arg1, %c0_i32 : i32, i32, i32
  }
}

</mosaic_0001>

<llo_original>
// kernel: tpu_custom_call.1
$region0: #{tpu_custom_call.1}
  #allocation0 [shape = 'u32[]', space=smem, size = 0x4, offset = 0x4, fixed_abs, tag = 'smem constant byte address 0x4 - core index']
  #allocation1 [shape = 'u32[144,128]{1,0:T(1,128)}', space=vmem, size = 0x12000, scoped, tag = 'internal scratch']
  %s0 = inlined_call_operand.hbm [shape: f32[2,8,32], index: 0, kind: input, shape index: {}]
  %s1 = inlined_call_operand.hbm [shape: f32[32,384], index: 1, kind: input, shape index: {}]
  %s2 = inlined_call_operand.hbm [shape: f32[2,8,384], index: 2, kind: output, shape index: {}]
  %s3 = sld [smem:[#allocation0]]
  $region49: #{tpu_custom_call.1} parent=0
    _
  %s5 = ssub.s32 1, %s3
  %s6 = scalar_select 0, %s5, %s3
  $region1: #{tpu_custom_call.1} parent=0
    #allocation2 [shape = 'u8[8192]{0}', space=vmem, size = 0x2000, scoped, tag = 'input window, operand 0']
    #allocation3 [shape = 's32[2]{0}', space=sflag, size = 0x8, scoped, tag = 'scoped memory for tpu_custom_call.1']
    #allocation4 [shape = 's32[2]{0}', space=sflag, size = 0x8, scoped, tag = 'scoped memory for tpu_custom_call.1']
    #allocation5 [shape = 'u8[49152]{0}', space=vmem, size = 0xc000, scoped, tag = 'input window, operand 1, single buffered']
    #allocation6 [shape = 's32[1]{0}', space=sflag, size = 0x4, scoped, tag = 'scoped memory for tpu_custom_call.1']
    #allocation7 [shape = 'u8[24576]{0}', space=vmem, size = 0x6000, scoped, tag = 'output window, operand 0']
    %7 = vsyncpa [#allocation3], 0
    %s8 = scalar_lea.sflag [#allocation3], 1
    %9 = vsyncpa %s8, 0
    %10 = vsyncpa [#allocation6], 0
    %11 = vsyncpa [#allocation4], 0
    %s12 = scalar_lea.sflag [#allocation4], 1
    %13 = vsyncpa %s12, 0
    loop: start=0, step=1, limit=4
    $region2: #{tpu_custom_call.1} parent=1 // loop_pre_header
      _
    $region3: #{tpu_custom_call.1} parent=1 // loop_header
      %s15 = sphi 0, %s19
      %p16 = scmp.ge.s32.totalorder %s15, 4
      %s22 = sphi 0, %s34
      %s23 = sphi 0, %s30
      %s24 = sphi 0, %s22
      %s25 = sphi 0, %s23
      %s26 = sphi 0, %s24
      %s27 = sphi 0, %s25
      %s39 = sphi 0, %s41
      %s42 = sphi 0, %s39
      %s43 = sphi 0, %s42
      %s59 = sphi 0, %s43
      %s63 = sphi 0, %s63
      %s65 = sphi 0, %s63
      %s66 = sphi 0, %s65
      %s80 = sphi 0, %s66
      %s88 = sphi 0, %s90
      %s91 = sphi 0, %s88
      %s92 = sphi 0, %s91
      %s108 = sphi 0, %s92
    $region4: #{tpu_custom_call.1} parent=1 // loop_header_branch
      %18 = sbr.rel (%p16) target = $region8
    $region5: #{tpu_custom_call.1} parent=1 // loop_body
      %s20 = ssub.s32 %s15, 1
      %s21 = ssub.s32 %s15, 2
      %s28 = sadd.s32 1, %s23
      %p29 = scmp.ge.s32.totalorder %s28, 1
      %s30 = scalar_select %p29, 0, %s28
      %s31 = sadd.s32 1, %s22
      %s32 = scalar_select %p29, %s31, %s22
      %p33 = scmp.ge.s32.totalorder %s32, 2
      %s34 = scalar_select %p33, 0, %s32
      %s35 = ssub.s32 %s22, %s34
      %s36 = ssub.s32 %s23, %s30
      %s37 = sor.u32 %s35, %s36
      %p38 = scmp.eq.s32.totalorder %s37, 0
      %s40 = sadd.s32 %s39, 1
      %s41 = scalar_select %p38, %s39, %s40
      %p44 = pneg %p38
      %p45 = scmp.eq.s32.totalorder %s15, 1
      %p46 = por %p44, %p45
      %p47 = scmp.ne.s32.totalorder %s39, %s42
      %p48 = scmp.eq.s32.totalorder %s15, 0
      %p49 = por %p47, %p48
      %p50 = scmp.ne.s32.totalorder %s39, %s42
      %p51 = scmp.eq.s32.totalorder %s20, 1
      %p52 = por %p50, %p51
      %p53 = scmp.ne.s32.totalorder %s42, %s43
      %p54 = scmp.eq.s32.totalorder %s20, 0
      %p55 = por %p53, %p54
      %p56 = scmp.ne.s32.totalorder %s42, %s43
      %p57 = scmp.eq.s32.totalorder %s21, 1
      %p58 = por %p56, %p57
      %p60 = scmp.ne.s32.totalorder %s43, %s59
      %p61 = scmp.eq.s32.totalorder %s21, 0
      %p62 = por %p60, %p61
      %s64 = sadd.s32 %s63, 1
      %p67 = scmp.eq.s32.totalorder %s15, 1
      %p68 = scmp.ne.s32.totalorder %s63, %s65
      %p69 = scmp.eq.s32.totalorder %s15, 0
      %p70 = por %p68, %p69
      %p71 = scmp.ne.s32.totalorder %s63, %s65
      %p72 = scmp.eq.s32.totalorder %s20, 1
      %p73 = por %p71, %p72
      %p74 = scmp.ne.s32.totalorder %s65, %s66
      %p75 = scmp.eq.s32.totalorder %s20, 0
      %p76 = por %p74, %p75
      %p77 = scmp.ne.s32.totalorder %s65, %s66
      %p78 = scmp.eq.s32.totalorder %s21, 1
      %p79 = por %p77, %p78
      %p81 = scmp.ne.s32.totalorder %s66, %s80
      %p82 = scmp.eq.s32.totalorder %s21, 0
      %p83 = por %p81, %p82
      %s84 = ssub.s32 %s22, %s34
      %s85 = ssub.s32 %s23, %s30
      %s86 = sor.u32 %s84, %s85
      %p87 = scmp.eq.s32.totalorder %s86, 0
      %s89 = sadd.s32 %s88, 1
      %s90 = scalar_select %p87, %s88, %s89
      %p93 = pneg %p87
      %p94 = scmp.eq.s32.totalorder %s15, 1
      %p95 = por %p93, %p94
      %p96 = scmp.ne.s32.totalorder %s88, %s91
      %p97 = scmp.eq.s32.totalorder %s15, 0
      %p98 = por %p96, %p97
      %p99 = scmp.ne.s32.totalorder %s88, %s91
      %p100 = scmp.eq.s32.totalorder %s20, 1
      %p101 = por %p99, %p100
      %p102 = scmp.ne.s32.totalorder %s91, %s92
      %p103 = scmp.eq.s32.totalorder %s20, 0
      %p104 = por %p102, %p103
      %p105 = scmp.ne.s32.totalorder %s91, %s92
      %p106 = scmp.eq.s32.totalorder %s21, 1
      %p107 = por %p105, %p106
      %p109 = scmp.ne.s32.totalorder %s92, %s108
      %p110 = scmp.eq.s32.totalorder %s21, 0
      %p111 = por %p109, %p110
      %p112 = scmp.le.s32.totalorder 1, %s15
      %p113 = scmp.lt.s32.totalorder %s15, 3
      %p114 = pnand %p112, %p113
      %p115 = pneg %p114
      // Predicated region
      $region9: #{tpu_custom_call.1} parent=5 // pred_check
        _
      $region10: #{tpu_custom_call.1} parent=5 // pred_check_branch
        %117 = sbr.rel (%p114) target = $region12
      $region11: #{tpu_custom_call.1} parent=5 // pred_region
        %s118 = ssub.s32 %s15, 1
        // Predicated region
        $region13: #{tpu_custom_call.1} parent=11 // pred_check
          %p119 = pneg %p76
        $region14: #{tpu_custom_call.1} parent=11 // pred_check_branch
          %121 = sbr.rel (%p119) target = $region16
        $region15: #{tpu_custom_call.1} parent=11 // pred_region
          %s123 = ssub.s32 1536, 1536
          %124 = vsyncadd [#allocation6], %s123
          %s125 = sshll.u32 [#allocation5], 4
          %s126 = int_to_ptr.vmem [resolvable:$true] %s125
          %131 = dma.hbm_to_vmem [thread:$0]  %s1, 1536, %s126, [#allocation6], 384, 384, 24
        $region16: #{tpu_custom_call.1} parent=11 // pred_fallthru
          _
      $region12: #{tpu_custom_call.1} parent=5 // pred_fallthru
        _
      %p132 = scmp.lt.s32.totalorder %s15, 2
      // Predicated region
      $region17: #{tpu_custom_call.1} parent=5 // pred_check
        %p133 = pneg %p132
      $region18: #{tpu_custom_call.1} parent=5 // pred_check_branch
        %135 = sbr.rel (%p133) target = $region20
      $region19: #{tpu_custom_call.1} parent=5 // pred_region
        // Predicated region
        $region21: #{tpu_custom_call.1} parent=19 // pred_check
          %p136 = pneg %p49
        $region22: #{tpu_custom_call.1} parent=19 // pred_check_branch
          %138 = sbr.rel (%p136) target = $region24
        $region23: #{tpu_custom_call.1} parent=19 // pred_region
          %s139 = sand.u32 %s39, 1
          %s140 = scalar_lea.sflag [#allocation3], %s139
          %s141 = sand.u32 %s39, 1
          %s142 = smul.addr %s141, 8
          %s143 = scalar_lea.vmem [#allocation2], %s142
          %s145 = ssub.s32 128, 128
          %146 = vsyncadd %s140, %s145
          %s147 = sadd.s32 %s23, %s22
          %s148 = smul.addr %s147, 128
          %s149 = scalar_lea.hbm %s0, %s148
          %s151 = sshll.u32 %s143, 4
          %s152 = int_to_ptr.vmem [resolvable:$true] %s151
          %154 = dma.hbm_to_vmem [thread:$0]  %s149, 128, %s152, %s140
        $region24: #{tpu_custom_call.1} parent=19 // pred_fallthru
          _
      $region20: #{tpu_custom_call.1} parent=5 // pred_fallthru
        _
      %p155 = scmp.le.s32.totalorder 1, %s15
      %p156 = scmp.lt.s32.totalorder %s15, 3
      %p157 = pnand %p155, %p156
      %p158 = pneg %p157
      // Predicated region
      $region25: #{tpu_custom_call.1} parent=5 // pred_check
        _
      $region26: #{tpu_custom_call.1} parent=5 // pred_check_branch
        %160 = sbr.rel (%p157) target = $region28
      $region27: #{tpu_custom_call.1} parent=5 // pred_region
        %s161 = ssub.s32 %s15, 1
        %s162 = sand.u32 %s42, 1
        %s163 = scalar_lea.sflag [#allocation3], %s162
        %s164 = sand.u32 %s42, 1
        %s165 = smul.addr %s164, 8
        %s166 = scalar_lea.vmem [#allocation2], %s165
        // Predicated region
        $region29: #{tpu_custom_call.1} parent=27 // pred_check
          %p167 = pneg %p55
        $region30: #{tpu_custom_call.1} parent=27 // pred_check_branch
          %169 = sbr.rel (%p167) target = $region32
        $region31: #{tpu_custom_call.1} parent=27 // pred_region
          %170 = dma.done %s163, 128
        $region32: #{tpu_custom_call.1} parent=27 // pred_fallthru
          _
        // Predicated region
        $region33: #{tpu_custom_call.1} parent=27 // pred_check
          %p171 = pneg %p76
        $region34: #{tpu_custom_call.1} parent=27 // pred_check_branch
          %173 = sbr.rel (%p171) target = $region36
        $region35: #{tpu_custom_call.1} parent=27 // pred_region
          %174 = dma.done [#allocation6], 1536
        $region36: #{tpu_custom_call.1} parent=27 // pred_fallthru
          _
        %s175 = sand.u32 %s42, 1
        %s176 = scalar_lea.sflag [#allocation3], %s175
        %s177 = sand.u32 %s42, 1
        %s178 = smul.addr %s177, 8
        %s179 = scalar_lea.vmem [#allocation2], %s178
        %p180 = pneg %p55
        %p181 = pneg %p52
        %p182 = pneg %p76
        %p183 = pneg %p73
        %p184 = pneg %p104
        %p185 = pneg %p101
        %s186 = sand.u32 %s91, 1
        %s187 = scalar_lea.sflag [#allocation4], %s186
        %s188 = sand.u32 %s91, 1
        %s189 = smul.addr %s188, 24
        %s190 = scalar_lea.vmem [#allocation7], %s189
        %v191 = vld [vmem:[%s166] sm:$0xff]
        %v192 = vld [vmem:[#allocation5] sm:$0xff]
        %v193 = vld [vmem:[#allocation5 + $0x8] sm:$0xff]
        %v194 = vld [vmem:[#allocation5 + $0x10] sm:$0xff]
        %v195 = vld [vmem:[#allocation5 + $0x18] sm:$0xff]
        %v196 = vld [vmem:[#allocation5 + $0x20] sm:$0xff]
        %v197 = vld [vmem:[#allocation5 + $0x28] sm:$0xff]
        %v198 = vld [vmem:[#allocation5 + $0x30] sm:$0xff]
        %v199 = vld [vmem:[#allocation5 + $0x38] sm:$0xff]
        %v200 = vld [vmem:[#allocation5 + $0x40] sm:$0xff]
        %v201 = vld [vmem:[#allocation5 + $0x48] sm:$0xff]
        %v202 = vld [vmem:[#allocation5 + $0x50] sm:$0xff]
        %v203 = vld [vmem:[#allocation5 + $0x58] sm:$0xff]
        %vm204 = vcmask 261120
        %v206 = vsel %vm204, %v191, 0
        %208 = vmatprep.subr.mxu0 %v193
        %209 = vmatpush1.msra.mxu0 %v192
        %210 = vmatprep.subr.mxu0 %v196
        %211 = vmatpush1.msra.mxu0 %v195
        %212 = vmatprep.subr.mxu0 %v199
        %213 = vmatpush1.msra.mxu0 %v198
        %214 = vmatprep.subr.mxu0 %v202
        %215 = vmatpush1.msra.mxu0 %v201
        %216 = vmatprep.subr.mxu0 0.0
        %217 = vmatpush1.msra.mxu0 0.0
        %218 = vmatprep.subr.mxu0 0.0
        %219 = vmatpush1.msra.mxu0 0.0
        %220 = vmatprep.subr.mxu0 0.0
        %221 = vmatpush1.msra.mxu0 0.0
        %222 = vmatprep.subr.mxu0 0.0
        %223 = vmatpush1.msra.mxu0 0.0
        %224 = vmatprep.subr.mxu0 0.0
        %225 = vmatpush1.msra.mxu0 0.0
        %226 = vmatprep.subr.mxu0 0.0
        %227 = vmatpush1.msra.mxu0 0.0
        %228 = vmatprep.subr.mxu0 0.0
        %229 = vmatpush1.msra.mxu0 0.0
        %230 = vmatprep.subr.mxu0 0.0
        %231 = vmatpush1.msra.mxu0 0.0
        %232 = vmatprep.subr.mxu0 0.0
        %233 = vmatpush1.msra.mxu0 0.0
        %234 = vmatprep.subr.mxu0 0.0
        %235 = vmatpush1.msra.mxu0 0.0
        %236 = vmatprep.subr.mxu0 0.0
        %237 = vmatpush1.msra.mxu0 0.0
        %238 = vmatprep.subr.mxu0 0.0
        %239 = vmatpush1.msra.mxu0 0.0
        %240 = vmatprep.subr.mxu0 0.0
        %241 = vmatpush1.msra.mxu0 0.0
        %242 = vmatprep.subr.mxu0 0.0
        %243 = vmatpush1.msra.mxu0 0.0
        %244 = vmatprep.subr.mxu0 0.0
        %245 = vmatpush1.msra.mxu0 0.0
        %246 = vmatprep.subr.mxu0 0.0
        %247 = vmatpush1.msra.mxu0 0.0
        %248 = vmatprep.subr.mxu0 0.0
        %249 = vmatpush1.msra.mxu0 0.0
        %250 = vmatprep.subr.mxu0 0.0
        %251 = vmatpush1.msra.mxu0 0.0
        %252 = vmatprep.subr.mxu0 0.0
        %253 = vmatpush1.msra.mxu0 0.0
        %254 = vmatprep.subr.mxu0 0.0
        %255 = vmatpush1.msra.mxu0 0.0
        %256 = vmatprep.subr.mxu0 0.0
        %257 = vmatpush1.msra.mxu0 0.0
        %258 = vmatprep.subr.mxu0 0.0
        %259 = vmatpush1.msra.mxu0 0.0
        %260 = vmatprep.subr.mxu0 0.0
        %261 = vmatpush1.msra.mxu0 0.0
        %262 = vmatprep.subr.mxu0 0.0
        %263 = vmatpush1.msra.mxu0 0.0
        %264 = vmatprep.subr.mxu0 0.0
        %265 = vmatpush1.msra.mxu0 0.0
        %266 = vmatprep.subr.mxu0 0.0
        %267 = vmatpush1.msra.mxu0 0.0
        %268 = vmatprep.subr.mxu0 0.0
        %269 = vmatpush1.msra.mxu0 0.0
        %270 = vmatprep.subr.mxu0 0.0
        %271 = vmatpush1.msra.mxu0 0.0
        %272 = vmatprep.mubr.f32.mxu0 0.0
        %273 = vmatmul.mubr.f32.gmra.mrb[0].mxu0 %v206
        %v274 = vpop.f32.mrb[0].mxu0
        %v275 = vadd.f32 0.0, %v274
        %v276 = vpop.f32.mrb[0].mxu0
        %v277 = vadd.f32 0.0, %v276
        %278 = vdwg.mxu0
        %279 = vmatprep.subr.mxu0 0.0
        %280 = vmatpush1.msra.mxu0 %v194
        %281 = vmatprep.subr.mxu0 0.0
        %282 = vmatpush1.msra.mxu0 %v197
        %283 = vmatprep.subr.mxu0 0.0
        %284 = vmatpush1.msra.mxu0 %v200
        %285 = vmatprep.subr.mxu0 0.0
        %286 = vmatpush1.msra.mxu0 %v203
        %287 = vmatprep.subr.mxu0 0.0
        %288 = vmatpush1.msra.mxu0 0.0
        %289 = vmatprep.subr.mxu0 0.0
        %290 = vmatpush1.msra.mxu0 0.0
        %291 = vmatprep.subr.mxu0 0.0
        %292 = vmatpush1.msra.mxu0 0.0
        %293 = vmatprep.subr.mxu0 0.0
        %294 = vmatpush1.msra.mxu0 0.0
        %295 = vmatprep.subr.mxu0 0.0
        %296 = vmatpush1.msra.mxu0 0.0
        %297 = vmatprep.subr.mxu0 0.0
        %298 = vmatpush1.msra.mxu0 0.0
        %299 = vmatprep.subr.mxu0 0.0
        %300 = vmatpush1.msra.mxu0 0.0
        %301 = vmatprep.subr.mxu0 0.0
        %302 = vmatpush1.msra.mxu0 0.0
        %303 = vmatprep.subr.mxu0 0.0
        %304 = vmatpush1.msra.mxu0 0.0
        %305 = vmatprep.subr.mxu0 0.0
        %306 = vmatpush1.msra.mxu0 0.0
        %307 = vmatprep.subr.mxu0 0.0
        %308 = vmatpush1.msra.mxu0 0.0
        %309 = vmatprep.subr.mxu0 0.0
        %310 = vmatpush1.msra.mxu0 0.0
        %311 = vmatprep.subr.mxu0 0.0
        %312 = vmatpush1.msra.mxu0 0.0
        %313 = vmatprep.subr.mxu0 0.0
        %314 = vmatpush1.msra.mxu0 0.0
        %315 = vmatprep.subr.mxu0 0.0
        %316 = vmatpush1.msra.mxu0 0.0
        %317 = vmatprep.subr.mxu0 0.0
        %318 = vmatpush1.msra.mxu0 0.0
        %319 = vmatprep.subr.mxu0 0.0
        %320 = vmatpush1.msra.mxu0 0.0
        %321 = vmatprep.subr.mxu0 0.0
        %322 = vmatpush1.msra.mxu0 0.0
        %323 = vmatprep.subr.mxu0 0.0
        %324 = vmatpush1.msra.mxu0 0.0
        %325 = vmatprep.subr.mxu0 0.0
        %326 = vmatpush1.msra.mxu0 0.0
        %327 = vmatprep.subr.mxu0 0.0
        %328 = vmatpush1.msra.mxu0 0.0
        %329 = vmatprep.subr.mxu0 0.0
        %330 = vmatpush1.msra.mxu0 0.0
        %331 = vmatprep.subr.mxu0 0.0
        %332 = vmatpush1.msra.mxu0 0.0
        %333 = vmatprep.subr.mxu0 0.0
        %334 = vmatpush1.msra.mxu0 0.0
        %335 = vmatprep.subr.mxu0 0.0
        %336 = vmatpush1.msra.mxu0 0.0
        %337 = vmatprep.subr.mxu0 0.0
        %338 = vmatpush1.msra.mxu0 0.0
        %339 = vmatprep.subr.mxu0 0.0
        %340 = vmatpush1.msra.mxu0 0.0
        %341 = vmatprep.subr.mxu0 0.0
        %342 = vmatpush1.msra.mxu0 0.0
        %343 = vmatprep.mubr.f32.mxu0 0.0
        %344 = vmatmul.mubr.f32.gmra.mrb[0].mxu0 %v206
        %v345 = vpop.f32.mrb[0].mxu0
        %v346 = vadd.f32 0.0, %v345
        %v347 = vpop.f32.mrb[0].mxu0
        %348 = vdwg.mxu0
        %349 = vst [vmem:[%s190] sm:$0xff] %v275
        %350 = vst [vmem:[%s190 + $0x8] sm:$0xff] %v277
        %351 = vst [vmem:[%s190 + $0x10] sm:$0xff] %v346
        %s352 = sand.u32 %s91, 1
        %s353 = scalar_lea.sflag [#allocation4], %s352
        %s354 = sand.u32 %s91, 1
        %s355 = smul.addr %s354, 24
        %s356 = scalar_lea.vmem [#allocation7], %s355
        // Predicated region
        $region37: #{tpu_custom_call.1} parent=27 // pred_check
          %p357 = pneg %p101
        $region38: #{tpu_custom_call.1} parent=27 // pred_check_branch
          %359 = sbr.rel (%p357) target = $region40
        $region39: #{tpu_custom_call.1} parent=27 // pred_region
          %s361 = ssub.s32 384, 384
          %362 = vsyncadd %s353, %s361
          %s363 = smul.addr %s25, 3
          %s364 = smul.addr %s24, 3
          %s365 = sadd.s32 %s363, %s364
          %s366 = smul.addr %s365, 128
          %s367 = scalar_lea.hbm %s2, %s366
          %s369 = sshll.u32 %s356, 4
          %s370 = int_to_ptr.vmem [resolvable:$true] %s369
          %372 = dma.vmem_to_hbm [thread:$0]  %s370, 384, %s367, %s353
        $region40: #{tpu_custom_call.1} parent=27 // pred_fallthru
          _
      $region28: #{tpu_custom_call.1} parent=5 // pred_fallthru
        _
      %p373 = scmp.le.s32.totalorder 2, %s15
      // Predicated region
      $region41: #{tpu_custom_call.1} parent=5 // pred_check
        %p374 = pneg %p373
      $region42: #{tpu_custom_call.1} parent=5 // pred_check_branch
        %376 = sbr.rel (%p374) target = $region44
      $region43: #{tpu_custom_call.1} parent=5 // pred_region
        %s377 = ssub.s32 %s15, 2
        // Predicated region
        $region45: #{tpu_custom_call.1} parent=43 // pred_check
          %p378 = pneg %p107
        $region46: #{tpu_custom_call.1} parent=43 // pred_check_branch
          %380 = sbr.rel (%p378) target = $region48
        $region47: #{tpu_custom_call.1} parent=43 // pred_region
          %s381 = sand.u32 %s92, 1
          %s382 = scalar_lea.sflag [#allocation4], %s381
          %s383 = sand.u32 %s92, 1
          %s384 = smul.addr %s383, 24
          %s385 = scalar_lea.vmem [#allocation7], %s384
          %386 = dma.done %s382, 384
        $region48: #{tpu_custom_call.1} parent=43 // pred_fallthru
          _
      $region44: #{tpu_custom_call.1} parent=5 // pred_fallthru
        _
    $region6: #{tpu_custom_call.1} parent=1 // loop_footer
      %s19 = sadd.s32 1, %s15
    $region7: #{tpu_custom_call.1} parent=1 // loop_footer_branch
      %14 = sbr.rel target = $region3
    $region8: #{tpu_custom_call.1} parent=1 // loop_exit
      _
    %387 = vsyncpa [#allocation3], 1
    %s388 = scalar_lea.sflag [#allocation3], 1
    %389 = vsyncpa %s388, 1
    %390 = vsyncpa [#allocation6], 1
    %391 = vsyncpa [#allocation4], 1
    %s392 = scalar_lea.sflag [#allocation4], 1
    %393 = vsyncpa %s392, 1

</llo_original>
